<compile_context>
chip_gen: v5e
topology: v5e:2x2
jax: 0.10.0
libtpu: 0.0.40
codegen_flags: <defaults>
</compile_context>

<pallas_src>
import functools

import jax
import jax.numpy as jnp
from jax import lax
from jax.experimental import pallas as pl
from jax.experimental.pallas import tpu as pltpu


_MASK_VALUE = -1e30  # large finite negative; avoids -inf - -inf NaN corners


def _pick_tile(dim, cap):
    """Largest multiple-of-8 tile <= cap that divides dim (else the full dim)."""
    for t in (cap, 512, 256, 128, 64, 32, 16, 8):
        if t <= cap and t <= dim and dim % t == 0:
            return t
    return dim


def _bf16_eup_available():
    """bf16 VPU/EUP exists on v6e / v7x but not on v5e and older."""
    try:
        kind = jax.devices()[0].device_kind.lower()
    except Exception:
        return False
    return any(tag in kind for tag in ("v6", "v7", "7x"))


# ---------------------------------------------------------------------------
# Pass 1: fused q/k/v projection (one MXU matmul per token tile, done once).
# ---------------------------------------------------------------------------
def _proj_kernel(x_ref, w3_ref, q_ref, kv_ref, *, head_size):
    x = x_ref[0]                                                 # (tt, C)
    p = jnp.dot(x, w3_ref[...], preferred_element_type=jnp.float32)  # (tt, 3H)
    q_ref[0] = p[:, :head_size].astype(q_ref.dtype)              # scaled q
    kv_ref[0] = p[:, head_size:].astype(kv_ref.dtype)            # [k | v]


def _project_qkv(x, w3, head_size, *, block_t=256):
    B, T, C = x.shape
    tt = _pick_tile(T, block_t)
    n_t = T // tt
    kernel = functools.partial(_proj_kernel, head_size=head_size)
    return pl.pallas_call(
        kernel,
        out_shape=(
            jax.ShapeDtypeStruct((B, T, head_size), x.dtype),
            jax.ShapeDtypeStruct((B, T, 2 * head_size), x.dtype),
        ),
        grid_spec=pltpu.PrefetchScalarGridSpec(
            num_scalar_prefetch=0,
            grid=(B, n_t),
            in_specs=[
                pl.BlockSpec((1, tt, C), lambda b, i: (b, i, 0)),
                pl.BlockSpec((C, 3 * head_size), lambda b, i: (0, 0)),
            ],
            out_specs=[
                pl.BlockSpec((1, tt, head_size), lambda b, i: (b, i, 0)),
                pl.BlockSpec((1, tt, 2 * head_size), lambda b, i: (b, i, 0)),
            ],
        ),
        compiler_params=pltpu.CompilerParams(
            dimension_semantics=("parallel", "parallel")),
    )(x, w3)


# ---------------------------------------------------------------------------
# Pass 2: flash attention over pre-projected q and fused [k|v].
# ---------------------------------------------------------------------------
def _attn_step(qi, kj, is_last, q_ref, kv_ref, o_ref, m_sc, l_sc, acc_sc,
               diff_sc, *, head_size, causal, bf16_probs):
    tq = q_ref.shape[1]
    tk = kv_ref.shape[1]

    @pl.when(kj == 0)
    def _init():
        m_sc[...] = jnp.full_like(m_sc, -jnp.inf)
        l_sc[...] = jnp.zeros_like(l_sc)
        acc_sc[...] = jnp.zeros_like(acc_sc)
        if causal:
            # Grid-invariant (col - row) pattern, built once per q tile and
            # reused for every kv step (saves 2 iotas + a sub per step).
            diff_sc[...] = (lax.broadcasted_iota(jnp.int32, (tq, tk), 1)
                            - lax.broadcasted_iota(jnp.int32, (tq, tk), 0))

    q = q_ref[0]                                                 # (tq, H)
    kv = kv_ref[0]                                               # (tk, 2H)
    k = kv[:, :head_size]
    v = kv[:, head_size:]

    # q @ k^T without materializing a transpose: contract H on both sides.
    s = lax.dot_general(q, k, (((1,), (1,)), ((), ())),
                        preferred_element_type=jnp.float32)      # (tq, tk) f32

    if causal:
        # valid iff col <= row  <=>  (col - row) <= q_start - k_start
        s = jnp.where(diff_sc[...] <= qi * tq - kj * tk, s, _MASK_VALUE)

    # Online softmax update (stats stay f32).
    m_prev = m_sc[...]
    m_new = jnp.maximum(m_prev, jnp.max(s, axis=-1, keepdims=True))
    alpha = jnp.exp(m_prev - m_new)
    s_shift = s - m_new
    if bf16_probs:
        p = jnp.exp(s_shift.astype(jnp.bfloat16))   # bf16 EUP (v6e/v7x only)
    else:
        p = jnp.exp(s_shift)
    l_sc[...] = alpha * l_sc[...] + jnp.sum(p, axis=-1, keepdims=True,
                                            dtype=jnp.float32)
    acc_sc[...] = alpha * acc_sc[...] + jnp.dot(
        p.astype(v.dtype), v, preferred_element_type=jnp.float32)
    m_sc[...] = m_new

    @pl.when(is_last)
    def _finalize():
        inv_l = pl.reciprocal(l_sc[...], approx=True)    # EUP vrcp, frees VALU
        o_ref[0] = (acc_sc[...] * inv_l).astype(o_ref.dtype)


def _attn_kernel_full(q_ref, kv_ref, o_ref, m_sc, l_sc, acc_sc, *,
                      head_size, bf16_probs):
    kj = pl.program_id(2)
    is_last = kj == pl.num_programs(2) - 1
    _attn_step(0, kj, is_last, q_ref, kv_ref, o_ref, m_sc, l_sc, acc_sc, None,
               head_size=head_size, causal=False, bf16_probs=bf16_probs)


def _attn_kernel_causal(qi_tbl, kj_tbl, q_ref, kv_ref, o_ref,
                        m_sc, l_sc, acc_sc, diff_sc, *, head_size, bf16_probs):
    step = pl.program_id(1)
    qi = qi_tbl[step]
    kj = kj_tbl[step]
    tq = q_ref.shape[1]
    tk = kv_ref.shape[1]
    # Last kv tile needed for this q tile: the next kv tile would start past
    # the last query row:  (kj+1)*tk > qi*tq + tq - 1  <=>  (kj+1)*tk >= (qi+1)*tq
    is_last = (kj + 1) * tk >= (qi + 1) * tq
    _attn_step(qi, kj, is_last, q_ref, kv_ref, o_ref, m_sc, l_sc, acc_sc,
               diff_sc, head_size=head_size, causal=True, bf16_probs=bf16_probs)


def head_forward(x, wk, wq, wv, *, is_decoder=False, block_q=128, block_k=256):
    """Single-head attention forward (eval mode).

    x: (B, T, C); wk/wq/wv: (C, head_size) (pre-transposed vs torch Linear).
    Returns (B, T, head_size).
    """
    B, T, C = x.shape
    H = wk.shape[1]
    scale = float(C) ** -0.5          # module scales by C**-0.5 (intentional)

    # Fold the softmax scale into the q projection columns and fuse all three
    # projection weights into one (C, 3H) operand (one matmul in the pre-pass,
    # one fewer input buffer).
    wq_scaled = (wq.astype(jnp.float32) * scale).astype(wq.dtype)
    w3 = jnp.concatenate([wq_scaled, wk, wv], axis=1)            # (C, 3H)

    # Pass 1: project q / [k|v] exactly once per token.
    q, kv = _project_qkv(x, w3, H)

    tq = _pick_tile(T, block_q)
    tk = _pick_tile(T, block_k)
    n_q = T // tq
    n_kv = T // tk

    bf16_probs = (x.dtype == jnp.bfloat16) and _bf16_eup_available()

    scratch = [
        pltpu.VMEM((tq, 1), jnp.float32),    # running row max m
        pltpu.VMEM((tq, 1), jnp.float32),    # running row sum l
        pltpu.VMEM((tq, H), jnp.float32),    # output accumulator
    ]

    if not is_decoder:
        kernel = functools.partial(_attn_kernel_full, head_size=H,
                                   bf16_probs=bf16_probs)
        grid_spec = pltpu.PrefetchScalarGridSpec(
            num_scalar_prefetch=0,
            grid=(B, n_q, n_kv),
            in_specs=[
                pl.BlockSpec((1, tq, H), lambda b, qi, kj: (b, qi, 0)),
                pl.BlockSpec((1, tk, 2 * H), lambda b, qi, kj: (b, kj, 0)),
                # TODO(synk): add pipeline_mode=pl.Buffered(3) on the kv spec
                # only if profiling shows exposed DMA on low-BW chips (v5e).
            ],
            out_specs=pl.BlockSpec((1, tq, H), lambda b, qi, kj: (b, qi, 0)),
            scratch_shapes=scratch,
        )
        dim_sem = ("parallel", "parallel", "arbitrary")
        operands = (q, kv)
    else:
        # Triangular causal grid: only (qi, kj) pairs that touch the causal
        # region exist, so fully-masked kv tiles cost neither DMA nor steps.
        pairs = [(qi, kj) for qi in range(n_q) for kj in range(n_kv)
                 if kj * tk <= qi * tq + tq - 1]
        qi_tbl = jnp.asarray([p[0] for p in pairs], dtype=jnp.int32)
        kj_tbl = jnp.asarray([p[1] for p in pairs], dtype=jnp.int32)
        kernel = functools.partial(_attn_kernel_causal, head_size=H,
                                   bf16_probs=bf16_probs)
        grid_spec = pltpu.PrefetchScalarGridSpec(
            num_scalar_prefetch=2,
            grid=(B, len(pairs)),
            in_specs=[
                pl.BlockSpec((1, tq, H),
                             lambda b, s, qi_t, kj_t: (b, qi_t[s], 0)),
                pl.BlockSpec((1, tk, 2 * H),
                             lambda b, s, qi_t, kj_t: (b, kj_t[s], 0)),
            ],
            out_specs=pl.BlockSpec((1, tq, H),
                                   lambda b, s, qi_t, kj_t: (b, qi_t[s], 0)),
            scratch_shapes=scratch + [pltpu.VMEM((tq, tk), jnp.int32)],
        )
        dim_sem = ("parallel", "arbitrary")
        operands = (qi_tbl, kj_tbl, q, kv)

    # Per-step VMEM (q/kv/out blocks + scratch) is well under the default
    # scoped limit on all generations (incl. v7x's 64 MiB physical VMEM), so
    # no vmem_limit_bytes override is needed at these tile sizes.
    return pl.pallas_call(
        kernel,
        out_shape=jax.ShapeDtypeStruct((B, T, H), x.dtype),
        grid_spec=grid_spec,
        compiler_params=pltpu.CompilerParams(dimension_semantics=dim_sem),
    )(*operands)


def head_forward_ref(x, wk, wq, wv, *, is_decoder=False):
    """Pure-JAX reference mirroring the PyTorch forward (eval mode), in f32."""
    B, T, C = x.shape
    xf = x.astype(jnp.float32)
    k = xf @ wk.astype(jnp.float32)
    q = xf @ wq.astype(jnp.float32)
    v = xf @ wv.astype(jnp.float32)
    wei = (q @ jnp.swapaxes(k, -2, -1)) * (C ** -0.5)
    if is_decoder:
        mask = jnp.tril(jnp.ones((T, T), dtype=bool))
        wei = jnp.where(mask, wei, -jnp.inf)
    wei = jax.nn.softmax(wei, axis=-1)
    return wei @ v


if __name__ == "__main__":
    key = jax.random.PRNGKey(0)

    def make_inputs(B, T, C, H, dtype):
        kx, kk, kq, kv = jax.random.split(key, 4)
        x = jax.random.normal(kx, (B, T, C), dtype=jnp.float32)
        wk = jax.random.normal(kk, (C, H), dtype=jnp.float32) * (C ** -0.5)
        wq = jax.random.normal(kq, (C, H), dtype=jnp.float32) * (C ** -0.5)
        wv = jax.random.normal(kv, (C, H), dtype=jnp.float32) * (C ** -0.5)
        return tuple(a.astype(dtype) for a in (x, wk, wq, wv))

    # (B, T, C, H, dtype, tol)
    cases = [
        (2, 8, 32, 16, jnp.float32, 2e-2),     # module's small shapes, 1 tile
        (2, 256, 32, 16, jnp.float32, 2e-2),   # multi q-tile online softmax
        (2, 512, 32, 16, jnp.float32, 2e-2),   # multi kv-tile + triangular grid
        (2, 8, 32, 16, jnp.bfloat16, 5e-2),    # bf16 MXU feed
        (2, 256, 32, 16, jnp.bfloat16, 5e-2),  # bf16 multi-tile
    ]
    for B, T, C, H, dtype, tol in cases:
        x, wk, wq, wv = make_inputs(B, T, C, H, dtype)
        for is_decoder in (False, True):
            out = head_forward(x, wk, wq, wv, is_decoder=is_decoder)
            out = jax.block_until_ready(out)
            ref = head_forward_ref(x, wk, wq, wv, is_decoder=is_decoder)
            assert out.shape == (B, T, H)
            err = float(jnp.max(jnp.abs(out.astype(jnp.float32) - ref)))
            assert err < tol, (
                f"mismatch dtype={dtype} T={T} is_decoder={is_decoder} "
                f"max_err={err}")

    print("KERNEL_OK")
</pallas_src>

<mosaic_0001>
module attributes {stable_mosaic.version = 11 : i64} {
  func.func @_proj_kernel(%arg0: i32, %arg1: i32, %arg2: memref<1x8x32xf32, #tpu.memory_space<vmem>>, %arg3: memref<32x48xf32, #tpu.memory_space<vmem>>, %arg4: memref<1x8x16xf32, #tpu.memory_space<vmem>>, %arg5: memref<1x8x32xf32, #tpu.memory_space<vmem>>) attributes {dimension_semantics = [#tpu.dimension_semantics<parallel>, #tpu.dimension_semantics<parallel>], iteration_bounds = array<i64: 2, 1>, scalar_prefetch = 0 : i64, scratch_operands = 0 : i64, tpu.core_type = #tpu.core_type<tc>, window_params = [{transform_indices = @transform_0, window_bounds = array<i64: 1, 8, 32>}, {pipeline_mode = #tpu.pipeline_mode<synchronous>, transform_indices = @transform_1, window_bounds = array<i64: 32, 48>}, {transform_indices = @transform_2, window_bounds = array<i64: 1, 8, 16>}, {transform_indices = @transform_3, window_bounds = array<i64: 1, 8, 32>}]} {
    %c0 = arith.constant 0 : index
    %c0_0 = arith.constant 0 : index
    %c0_1 = arith.constant 0 : index
    %0 = vector.load %arg2[%c0, %c0_0, %c0_1] : memref<1x8x32xf32, #tpu.memory_space<vmem>>, vector<1x8x32xf32>
    %1 = vector.shape_cast %0 : vector<1x8x32xf32> to vector<8x32xf32>
    %c0_2 = arith.constant 0 : index
    %c0_3 = arith.constant 0 : index
    %2 = vector.load %arg3[%c0_2, %c0_3] : memref<32x48xf32, #tpu.memory_space<vmem>>, vector<32x48xf32>
    %cst = arith.constant dense<0.000000e+00> : vector<8x48xf32>
    %3 = tpu.matmul %1, %2, %cst {dimension_numbers = #tpu.dot_dimension_numbers<[1], [0], [0], [1], [0, 0, 1, 1], [], []>} : vector<8x32xf32>, vector<32x48xf32>, vector<8x48xf32> -> vector<8x48xf32>
    %4 = vector.extract_strided_slice %3 {offsets = [0, 0], sizes = [8, 16], strides = [1, 1]} : vector<8x48xf32> to vector<8x16xf32>
    %c0_4 = arith.constant 0 : index
    %c0_5 = arith.constant 0 : index
    %c0_6 = arith.constant 0 : index
    %5 = vector.load %arg4[%c0_4, %c0_5, %c0_6] : memref<1x8x16xf32, #tpu.memory_space<vmem>>, vector<1x8x16xf32>
    %6 = vector.shape_cast %5 : vector<1x8x16xf32> to vector<8x16xf32>
    %7 = vector.shape_cast %4 : vector<8x16xf32> to vector<1x8x16xf32>
    tpu.vector_store %arg4[%c0_4, %c0_5, %c0_6], %7 {strides = array<i32>} : memref<1x8x16xf32, #tpu.memory_space<vmem>>, vector<1x8x16xf32>,
    %8 = vector.extract_strided_slice %3 {offsets = [0, 16], sizes = [8, 32], strides = [1, 1]} : vector<8x48xf32> to vector<8x32xf32>
    %c0_7 = arith.constant 0 : index
    %c0_8 = arith.constant 0 : index
    %c0_9 = arith.constant 0 : index
    %9 = vector.load %arg5[%c0_7, %c0_8, %c0_9] : memref<1x8x32xf32, #tpu.memory_space<vmem>>, vector<1x8x32xf32>
    %10 = vector.shape_cast %9 : vector<1x8x32xf32> to vector<8x32xf32>
    %11 = vector.shape_cast %8 : vector<8x32xf32> to vector<1x8x32xf32>
    tpu.vector_store %arg5[%c0_7, %c0_8, %c0_9], %11 {strides = array<i32>} : memref<1x8x32xf32, #tpu.memory_space<vmem>>, vector<1x8x32xf32>,
    return
  }
  func.func @transform_0(%arg0: i32, %arg1: i32) -> (i32, i32, i32) {
    %c0_i32 = arith.constant 0 : i32
    %c0_i32_0 = arith.constant 0 : i32
    return %arg0, %arg1, %c0_i32 : i32, i32, i32
  }
  func.func @transform_1(%arg0: i32, %arg1: i32) -> (i32, i32) {
    %c0_i32 = arith.constant 0 : i32
    %c0_i32_0 = arith.constant 0 : i32
    %c0_i32_1 = arith.constant 0 : i32
    return %c0_i32, %c0_i32_0 : i32, i32
  }
  func.func @transform_2(%arg0: i32, %arg1: i32) -> (i32, i32, i32) {
    %c0_i32 = arith.constant 0 : i32
    %c0_i32_0 = arith.constant 0 : i32
    return %arg0, %arg1, %c0_i32 : i32, i32, i32
  }
  func.func @transform_3(%arg0: i32, %arg1: i32) -> (i32, i32, i32) {
    %c0_i32 = arith.constant 0 : i32
    %c0_i32_0 = arith.constant 0 : i32
    return %arg0, %arg1, %c0_i32 : i32, i32, i32
  }
}

</mosaic_0001>

<llo_original>
// kernel: tpu_custom_call.1
$region0: #{tpu_custom_call.1}
  #allocation0 [shape = 'u32[]', space=smem, size = 0x4, offset = 0x4, fixed_abs, tag = 'smem constant byte address 0x4 - core index']
  #allocation1 [shape = 'u32[72,128]{1,0:T(1,128)}', space=vmem, size = 0x9000, scoped, tag = 'internal scratch']
  %s0 = inlined_call_operand.hbm [shape: f32[2,8,32], index: 0, kind: input, shape index: {}]
  %s1 = inlined_call_operand.hbm [shape: f32[32,48], index: 1, kind: input, shape index: {}]
  %s2 = inlined_call_operand.hbm [shape: f32[2,8,16], index: 2, kind: output, shape index: {0}]
  %s3 = inlined_call_operand.hbm [shape: f32[2,8,32], index: 3, kind: output, shape index: {1}]
  %4 = xla_tuple %s2, %s3
  %s5 = sld [smem:[#allocation0]]
  $region57: #{tpu_custom_call.1} parent=0
    _
  %s7 = ssub.s32 1, %s5
  %s8 = scalar_select 0, %s7, %s5
  $region1: #{tpu_custom_call.1} parent=0
    #allocation2 [shape = 'u8[8192]{0}', space=vmem, size = 0x2000, scoped, tag = 'input window, operand 0']
    #allocation3 [shape = 's32[2]{0}', space=sflag, size = 0x8, scoped, tag = 'scoped memory for tpu_custom_call.1']
    #allocation4 [shape = 's32[2]{0}', space=sflag, size = 0x8, scoped, tag = 'scoped memory for tpu_custom_call.1']
    #allocation5 [shape = 'u8[16384]{0}', space=vmem, size = 0x4000, scoped, tag = 'input window, operand 1, single buffered']
    #allocation6 [shape = 's32[1]{0}', space=sflag, size = 0x4, scoped, tag = 'scoped memory for tpu_custom_call.1']
    #allocation7 [shape = 'u8[8192]{0}', space=vmem, size = 0x2000, scoped, tag = 'output window, operand 0']
    #allocation8 [shape = 'u8[8192]{0}', space=vmem, size = 0x2000, scoped, tag = 'output window, operand 1']
    #allocation9 [shape = 's32[2]{0}', space=sflag, size = 0x8, scoped, tag = 'scoped memory for tpu_custom_call.1']
    %9 = vsyncpa [#allocation3], 0
    %s10 = scalar_lea.sflag [#allocation3], 1
    %11 = vsyncpa %s10, 0
    %12 = vsyncpa [#allocation6], 0
    %13 = vsyncpa [#allocation4], 0
    %s14 = scalar_lea.sflag [#allocation4], 1
    %15 = vsyncpa %s14, 0
    %16 = vsyncpa [#allocation9], 0
    %s17 = scalar_lea.sflag [#allocation9], 1
    %18 = vsyncpa %s17, 0
    loop: start=0, step=1, limit=4
    $region2: #{tpu_custom_call.1} parent=1 // loop_pre_header
      _
    $region3: #{tpu_custom_call.1} parent=1 // loop_header
      %s20 = sphi 0, %s24
      %p21 = scmp.ge.s32.totalorder %s20, 4
      %s27 = sphi 0, %s39
      %s28 = sphi 0, %s35
      %s29 = sphi 0, %s27
      %s30 = sphi 0, %s28
      %s31 = sphi 0, %s29
      %s32 = sphi 0, %s30
      %s44 = sphi 0, %s46
      %s47 = sphi 0, %s44
      %s48 = sphi 0, %s47
      %s64 = sphi 0, %s48
      %s68 = sphi 0, %s68
      %s70 = sphi 0, %s68
      %s71 = sphi 0, %s70
      %s85 = sphi 0, %s71
      %s93 = sphi 0, %s95
      %s96 = sphi 0, %s93
      %s97 = sphi 0, %s96
      %s113 = sphi 0, %s97
      %s121 = sphi 0, %s123
      %s124 = sphi 0, %s121
      %s125 = sphi 0, %s124
      %s141 = sphi 0, %s125
    $region4: #{tpu_custom_call.1} parent=1 // loop_header_branch
      %23 = sbr.rel (%p21) target = $region8
    $region5: #{tpu_custom_call.1} parent=1 // loop_body
      %s25 = ssub.s32 %s20, 1
      %s26 = ssub.s32 %s20, 2
      %s33 = sadd.s32 1, %s28
      %p34 = scmp.ge.s32.totalorder %s33, 1
      %s35 = scalar_select %p34, 0, %s33
      %s36 = sadd.s32 1, %s27
      %s37 = scalar_select %p34, %s36, %s27
      %p38 = scmp.ge.s32.totalorder %s37, 2
      %s39 = scalar_select %p38, 0, %s37
      %s40 = ssub.s32 %s27, %s39
      %s41 = ssub.s32 %s28, %s35
      %s42 = sor.u32 %s40, %s41
      %p43 = scmp.eq.s32.totalorder %s42, 0
      %s45 = sadd.s32 %s44, 1
      %s46 = scalar_select %p43, %s44, %s45
      %p49 = pneg %p43
      %p50 = scmp.eq.s32.totalorder %s20, 1
      %p51 = por %p49, %p50
      %p52 = scmp.ne.s32.totalorder %s44, %s47
      %p53 = scmp.eq.s32.totalorder %s20, 0
      %p54 = por %p52, %p53
      %p55 = scmp.ne.s32.totalorder %s44, %s47
      %p56 = scmp.eq.s32.totalorder %s25, 1
      %p57 = por %p55, %p56
      %p58 = scmp.ne.s32.totalorder %s47, %s48
      %p59 = scmp.eq.s32.totalorder %s25, 0
      %p60 = por %p58, %p59
      %p61 = scmp.ne.s32.totalorder %s47, %s48
      %p62 = scmp.eq.s32.totalorder %s26, 1
      %p63 = por %p61, %p62
      %p65 = scmp.ne.s32.totalorder %s48, %s64
      %p66 = scmp.eq.s32.totalorder %s26, 0
      %p67 = por %p65, %p66
      %s69 = sadd.s32 %s68, 1
      %p72 = scmp.eq.s32.totalorder %s20, 1
      %p73 = scmp.ne.s32.totalorder %s68, %s70
      %p74 = scmp.eq.s32.totalorder %s20, 0
      %p75 = por %p73, %p74
      %p76 = scmp.ne.s32.totalorder %s68, %s70
      %p77 = scmp.eq.s32.totalorder %s25, 1
      %p78 = por %p76, %p77
      %p79 = scmp.ne.s32.totalorder %s70, %s71
      %p80 = scmp.eq.s32.totalorder %s25, 0
      %p81 = por %p79, %p80
      %p82 = scmp.ne.s32.totalorder %s70, %s71
      %p83 = scmp.eq.s32.totalorder %s26, 1
      %p84 = por %p82, %p83
      %p86 = scmp.ne.s32.totalorder %s71, %s85
      %p87 = scmp.eq.s32.totalorder %s26, 0
      %p88 = por %p86, %p87
      %s89 = ssub.s32 %s27, %s39
      %s90 = ssub.s32 %s28, %s35
      %s91 = sor.u32 %s89, %s90
      %p92 = scmp.eq.s32.totalorder %s91, 0
      %s94 = sadd.s32 %s93, 1
      %s95 = scalar_select %p92, %s93, %s94
      %p98 = pneg %p92
      %p99 = scmp.eq.s32.totalorder %s20, 1
      %p100 = por %p98, %p99
      %p101 = scmp.ne.s32.totalorder %s93, %s96
      %p102 = scmp.eq.s32.totalorder %s20, 0
      %p103 = por %p101, %p102
      %p104 = scmp.ne.s32.totalorder %s93, %s96
      %p105 = scmp.eq.s32.totalorder %s25, 1
      %p106 = por %p104, %p105
      %p107 = scmp.ne.s32.totalorder %s96, %s97
      %p108 = scmp.eq.s32.totalorder %s25, 0
      %p109 = por %p107, %p108
      %p110 = scmp.ne.s32.totalorder %s96, %s97
      %p111 = scmp.eq.s32.totalorder %s26, 1
      %p112 = por %p110, %p111
      %p114 = scmp.ne.s32.totalorder %s97, %s113
      %p115 = scmp.eq.s32.totalorder %s26, 0
      %p116 = por %p114, %p115
      %s117 = ssub.s32 %s27, %s39
      %s118 = ssub.s32 %s28, %s35
      %s119 = sor.u32 %s117, %s118
      %p120 = scmp.eq.s32.totalorder %s119, 0
      %s122 = sadd.s32 %s121, 1
      %s123 = scalar_select %p120, %s121, %s122
      %p126 = pneg %p120
      %p127 = scmp.eq.s32.totalorder %s20, 1
      %p128 = por %p126, %p127
      %p129 = scmp.ne.s32.totalorder %s121, %s124
      %p130 = scmp.eq.s32.totalorder %s20, 0
      %p131 = por %p129, %p130
      %p132 = scmp.ne.s32.totalorder %s121, %s124
      %p133 = scmp.eq.s32.totalorder %s25, 1
      %p134 = por %p132, %p133
      %p135 = scmp.ne.s32.totalorder %s124, %s125
      %p136 = scmp.eq.s32.totalorder %s25, 0
      %p137 = por %p135, %p136
      %p138 = scmp.ne.s32.totalorder %s124, %s125
      %p139 = scmp.eq.s32.totalorder %s26, 1
      %p140 = por %p138, %p139
      %p142 = scmp.ne.s32.totalorder %s125, %s141
      %p143 = scmp.eq.s32.totalorder %s26, 0
      %p144 = por %p142, %p143
      %p145 = scmp.le.s32.totalorder 1, %s20
      %p146 = scmp.lt.s32.totalorder %s20, 3
      %p147 = pnand %p145, %p146
      %p148 = pneg %p147
      // Predicated region
      $region9: #{tpu_custom_call.1} parent=5 // pred_check
        _
      $region10: #{tpu_custom_call.1} parent=5 // pred_check_branch
        %150 = sbr.rel (%p147) target = $region12
      $region11: #{tpu_custom_call.1} parent=5 // pred_region
        %s151 = ssub.s32 %s20, 1
        // Predicated region
        $region13: #{tpu_custom_call.1} parent=11 // pred_check
          %p152 = pneg %p81
        $region14: #{tpu_custom_call.1} parent=11 // pred_check_branch
          %154 = sbr.rel (%p152) target = $region16
        $region15: #{tpu_custom_call.1} parent=11 // pred_region
          %156 = vsyncadd [#allocation6], 0
          %s157 = sshll.u32 %s1, 4
          %s158 = int_to_ptr.hbm [resolvable:$true] %s157
          %s159 = sshll.u32 [#allocation5], 4
          %s160 = int_to_ptr.vmem [resolvable:$true] %s159
          %165 = dma.hbm_to_vmem [thread:$0]  %s158, 512, %s160, [#allocation6], 128, 128, 8
        $region16: #{tpu_custom_call.1} parent=11 // pred_fallthru
          _
      $region12: #{tpu_custom_call.1} parent=5 // pred_fallthru
        _
      %p166 = scmp.lt.s32.totalorder %s20, 2
      // Predicated region
      $region17: #{tpu_custom_call.1} parent=5 // pred_check
        %p167 = pneg %p166
      $region18: #{tpu_custom_call.1} parent=5 // pred_check_branch
        %169 = sbr.rel (%p167) target = $region20
      $region19: #{tpu_custom_call.1} parent=5 // pred_region
        // Predicated region
        $region21: #{tpu_custom_call.1} parent=19 // pred_check
          %p170 = pneg %p54
        $region22: #{tpu_custom_call.1} parent=19 // pred_check_branch
          %172 = sbr.rel (%p170) target = $region24
        $region23: #{tpu_custom_call.1} parent=19 // pred_region
          %s173 = sand.u32 %s44, 1
          %s174 = scalar_lea.sflag [#allocation3], %s173
          %s175 = sand.u32 %s44, 1
          %s176 = smul.addr %s175, 8
          %s177 = scalar_lea.vmem [#allocation2], %s176
          %179 = vsyncadd %s174, 0
          %s180 = sadd.s32 %s28, %s27
          %s181 = smul.addr %s180, 8
          %s182 = scalar_lea.hbm %s0, %s181
          %s184 = sshll.u32 %s182, 4
          %s185 = int_to_ptr.hbm [resolvable:$true] %s184
          %s186 = sshll.u32 %s177, 4
          %s187 = int_to_ptr.vmem [resolvable:$true] %s186
          %189 = dma.hbm_to_vmem [thread:$0]  %s185, 128, %s187, %s174
        $region24: #{tpu_custom_call.1} parent=19 // pred_fallthru
          _
      $region20: #{tpu_custom_call.1} parent=5 // pred_fallthru
        _
      %p190 = scmp.le.s32.totalorder 1, %s20
      %p191 = scmp.lt.s32.totalorder %s20, 3
      %p192 = pnand %p190, %p191
      %p193 = pneg %p192
      // Predicated region
      $region25: #{tpu_custom_call.1} parent=5 // pred_check
        _
      $region26: #{tpu_custom_call.1} parent=5 // pred_check_branch
        %195 = sbr.rel (%p192) target = $region28
      $region27: #{tpu_custom_call.1} parent=5 // pred_region
        %s196 = ssub.s32 %s20, 1
        %s197 = sand.u32 %s47, 1
        %s198 = scalar_lea.sflag [#allocation3], %s197
        %s199 = sand.u32 %s47, 1
        %s200 = smul.addr %s199, 8
        %s201 = scalar_lea.vmem [#allocation2], %s200
        // Predicated region
        $region29: #{tpu_custom_call.1} parent=27 // pred_check
          %p202 = pneg %p60
        $region30: #{tpu_custom_call.1} parent=27 // pred_check_branch
          %204 = sbr.rel (%p202) target = $region32
        $region31: #{tpu_custom_call.1} parent=27 // pred_region
          %206 = dma.done %s198, 128
        $region32: #{tpu_custom_call.1} parent=27 // pred_fallthru
          _
        // Predicated region
        $region33: #{tpu_custom_call.1} parent=27 // pred_check
          %p207 = pneg %p81
        $region34: #{tpu_custom_call.1} parent=27 // pred_check_branch
          %209 = sbr.rel (%p207) target = $region36
        $region35: #{tpu_custom_call.1} parent=27 // pred_region
          %211 = dma.done [#allocation6], 512
        $region36: #{tpu_custom_call.1} parent=27 // pred_fallthru
          _
        %s212 = sand.u32 %s47, 1
        %s213 = scalar_lea.sflag [#allocation3], %s212
        %s214 = sand.u32 %s47, 1
        %s215 = smul.addr %s214, 8
        %s216 = scalar_lea.vmem [#allocation2], %s215
        %p217 = pneg %p60
        %p218 = pneg %p57
        %p219 = pneg %p81
        %p220 = pneg %p78
        %p221 = pneg %p109
        %p222 = pneg %p106
        %s223 = sand.u32 %s96, 1
        %s224 = scalar_lea.sflag [#allocation4], %s223
        %s225 = sand.u32 %s96, 1
        %s226 = smul.addr %s225, 8
        %s227 = scalar_lea.vmem [#allocation7], %s226
        %p228 = pneg %p137
        %p229 = pneg %p134
        %s230 = sand.u32 %s124, 1
        %s231 = scalar_lea.sflag [#allocation9], %s230
        %s232 = sand.u32 %s124, 1
        %s233 = smul.addr %s232, 8
        %s234 = scalar_lea.vmem [#allocation8], %s233
        %v235 = vld [vmem:[%s201] sm:$0xff]
        %v236 = vld [vmem:[#allocation5] sm:$0xff]
        %v237 = vld [vmem:[#allocation5 + $0x8] sm:$0xff]
        %v238 = vld [vmem:[#allocation5 + $0x10] sm:$0xff]
        %v239 = vld [vmem:[#allocation5 + $0x18] sm:$0xff]
        %vm240 = vcmask 261120
        %v242 = vsel %vm240, %v235, 0
        %244 = vmatpush.msra.mxu0 0.0
        %245 = vmatpush.msra.mxu0 0.0
        %246 = vmatpush.msra.mxu0 0.0
        %247 = vmatpush.msra.mxu0 0.0
        %248 = vmatpush.msra.mxu0 0.0
        %249 = vmatpush.msra.mxu0 0.0
        %250 = vmatpush.msra.mxu0 0.0
        %251 = vmatpush.msra.mxu0 0.0
        %252 = vmatpush.msra.mxu0 0.0
        %253 = vmatpush.msra.mxu0 0.0
        %254 = vmatpush.msra.mxu0 0.0
        %255 = vmatpush.msra.mxu0 0.0
        %256 = vmatpush.msra.mxu0 %v239
        %257 = vmatpush.msra.mxu0 %v238
        %258 = vmatpush.msra.mxu0 %v237
        %259 = vmatpush.msra.mxu0 %v236
        %260 = vmatmul.f32.gmra.mxu0 %v242
        %v261 = vpop.f32.mrf.mxu0
        %v262 = vadd.f32 0.0, %v261
        %263 = vdwg.mxu0
        %vm264 = vcmask 130048
        %265 = vst.msk [vmem:[%s227] sm:$0xff] %vm264, %v262
        %267 = vrot.lane.b32.xlu0 %v262, 112
        %v268 = vpop.permute.xlu0 %267
        %270 = vst.msk [vmem:[%s234] sm:$0xff] %vm240, %v268
        %s271 = sand.u32 %s96, 1
        %s272 = scalar_lea.sflag [#allocation4], %s271
        %s273 = sand.u32 %s96, 1
        %s274 = smul.addr %s273, 8
        %s275 = scalar_lea.vmem [#allocation7], %s274
        %s276 = sand.u32 %s124, 1
        %s277 = scalar_lea.sflag [#allocation9], %s276
        %s278 = sand.u32 %s124, 1
        %s279 = smul.addr %s278, 8
        %s280 = scalar_lea.vmem [#allocation8], %s279
        // Predicated region
        $region37: #{tpu_custom_call.1} parent=27 // pred_check
          %p281 = pneg %p106
        $region38: #{tpu_custom_call.1} parent=27 // pred_check_branch
          %283 = sbr.rel (%p281) target = $region40
        $region39: #{tpu_custom_call.1} parent=27 // pred_region
          %285 = vsyncadd %s272, 0
          %s286 = sadd.s32 %s30, %s29
          %s287 = smul.addr %s286, 8
          %s288 = scalar_lea.hbm %s2, %s287
          %s290 = sshll.u32 %s275, 4
          %s291 = int_to_ptr.vmem [resolvable:$true] %s290
          %s292 = sshll.u32 %s288, 4
          %s293 = int_to_ptr.hbm [resolvable:$true] %s292
          %295 = dma.vmem_to_hbm [thread:$0]  %s291, 128, %s293, %s272
        $region40: #{tpu_custom_call.1} parent=27 // pred_fallthru
          _
        // Predicated region
        $region41: #{tpu_custom_call.1} parent=27 // pred_check
          %p296 = pneg %p134
        $region42: #{tpu_custom_call.1} parent=27 // pred_check_branch
          %298 = sbr.rel (%p296) target = $region44
        $region43: #{tpu_custom_call.1} parent=27 // pred_region
          %300 = vsyncadd %s277, 0
          %s301 = sadd.s32 %s30, %s29
          %s302 = smul.addr %s301, 8
          %s303 = scalar_lea.hbm %s3, %s302
          %s305 = sshll.u32 %s280, 4
          %s306 = int_to_ptr.vmem [resolvable:$true] %s305
          %s307 = sshll.u32 %s303, 4
          %s308 = int_to_ptr.hbm [resolvable:$true] %s307
          %310 = dma.vmem_to_hbm [thread:$0]  %s306, 128, %s308, %s277
        $region44: #{tpu_custom_call.1} parent=27 // pred_fallthru
          _
      $region28: #{tpu_custom_call.1} parent=5 // pred_fallthru
        _
      %p311 = scmp.le.s32.totalorder 2, %s20
      // Predicated region
      $region45: #{tpu_custom_call.1} parent=5 // pred_check
        %p312 = pneg %p311
      $region46: #{tpu_custom_call.1} parent=5 // pred_check_branch
        %314 = sbr.rel (%p312) target = $region48
      $region47: #{tpu_custom_call.1} parent=5 // pred_region
        %s315 = ssub.s32 %s20, 2
        // Predicated region
        $region49: #{tpu_custom_call.1} parent=47 // pred_check
          %p316 = pneg %p112
        $region50: #{tpu_custom_call.1} parent=47 // pred_check_branch
          %318 = sbr.rel (%p316) target = $region52
        $region51: #{tpu_custom_call.1} parent=47 // pred_region
          %s319 = sand.u32 %s97, 1
          %s320 = scalar_lea.sflag [#allocation4], %s319
          %s321 = sand.u32 %s97, 1
          %s322 = smul.addr %s321, 8
          %s323 = scalar_lea.vmem [#allocation7], %s322
          %325 = dma.done %s320, 128
        $region52: #{tpu_custom_call.1} parent=47 // pred_fallthru
          _
        // Predicated region
        $region53: #{tpu_custom_call.1} parent=47 // pred_check
          %p326 = pneg %p140
        $region54: #{tpu_custom_call.1} parent=47 // pred_check_branch
          %328 = sbr.rel (%p326) target = $region56
        $region55: #{tpu_custom_call.1} parent=47 // pred_region
          %s329 = sand.u32 %s125, 1
          %s330 = scalar_lea.sflag [#allocation9], %s329
          %s331 = sand.u32 %s125, 1
          %s332 = smul.addr %s331, 8
          %s333 = scalar_lea.vmem [#allocation8], %s332
          %335 = dma.done %s330, 128
        $region56: #{tpu_custom_call.1} parent=47 // pred_fallthru
          _
      $region48: #{tpu_custom_call.1} parent=5 // pred_fallthru
        _
    $region6: #{tpu_custom_call.1} parent=1 // loop_footer
      %s24 = sadd.s32 1, %s20
    $region7: #{tpu_custom_call.1} parent=1 // loop_footer_branch
      %19 = sbr.rel target = $region3
    $region8: #{tpu_custom_call.1} parent=1 // loop_exit
      _
    %336 = vsyncpa [#allocation3], 1
    %s337 = scalar_lea.sflag [#allocation3], 1
    %338 = vsyncpa %s337, 1
    %339 = vsyncpa [#allocation6], 1
    %340 = vsyncpa [#allocation4], 1
    %s341 = scalar_lea.sflag [#allocation4], 1
    %342 = vsyncpa %s341, 1
    %343 = vsyncpa [#allocation9], 1
    %s344 = scalar_lea.sflag [#allocation9], 1
    %345 = vsyncpa %s344, 1

</llo_original>
